<compile_context>
chip_gen: v7x
topology: tpu7x:2x2x1
jax: 0.10.0
libtpu: 0.0.40
codegen_flags: <defaults>
</compile_context>

<pallas_src>
import functools

import jax
import jax.numpy as jnp
from jax import lax
from jax.experimental import pallas as pl
from jax.experimental.pallas import tpu as pltpu


def _vmem_capacity_bytes():
    """Physical per-core VMEM; conservative fallback (v7x) if query fails."""
    try:
        return int(pltpu.get_tpu_info().vmem_capacity_bytes)
    except Exception:
        return 64 * 1024 * 1024


def _choose_block_b(B, per_batch_bytes, vmem_budget_bytes):
    """Largest batch-block whose full footprint fits the VMEM budget.

    No sublane rounding (BB is a leading, non-tiled block dim). When B is
    non-trivial, keep >= 4 grid steps so the 'parallel' batch axis gives each
    v7x TensorCore at least 2 pipelined steps (DMA/compute overlap per core).
    """
    bb = max(1, int(vmem_budget_bytes) // max(1, int(per_batch_bytes)))
    bb = min(bb, 1024, max(B, 1))
    if B > 16:
        bb = min(bb, pl.cdiv(B, 4))
    return max(1, bb)


def _corr_kernel_m1(x_ref, t_ref, o_ref):
    """convca fast path, M == 1.

    x_ref: (BB, 1, S), t_ref: (BB, N, S), o_ref: (BB, 1, N).
    Single fused broadcast-multiply + lane reduce (VPU/XLU) + rsqrt (EUP).
    No MXU, no per-template slices, no concatenate.
    """
    x = x_ref[...].astype(jnp.float32)                      # (BB, 1, S)
    t = t_ref[...].astype(jnp.float32)                      # (BB, N, S)
    xt = jnp.sum(x * t, axis=-1)                            # (BB, N)
    inv_x = lax.rsqrt(jnp.sum(x * x, axis=-1))              # (BB, 1)
    inv_t = lax.rsqrt(jnp.sum(t * t, axis=-1))              # (BB, N)
    res = xt * inv_x * inv_t                                 # (BB, N)
    o_ref[...] = res[:, None, :].astype(o_ref.dtype)         # (BB, 1, N)


def _corr_kernel_general(x_ref, t_ref, o_ref):
    """General path, arbitrary M.

    x_ref: (BB, M, S), t_ref: (BB, N, S), o_ref: (BB, M, N).
    Batched MXU contraction on the last axes (no explicit t.T); normalization
    POST-scaled onto the small (BB, M, N) result instead of pre-normalizing
    the big operands (saves ~ (M+N)*S VPU muls + (M+N)*S*4 bytes of live
    copies per batch, and matches the reference's divide-after-matmul order).
    """
    x = x_ref[...].astype(jnp.float32)                       # (BB, M, S)
    t = t_ref[...].astype(jnp.float32)                       # (BB, N, S)
    out = lax.dot_general(
        x, t,
        dimension_numbers=(((2,), (2,)), ((0,), (0,))),
        preferred_element_type=jnp.float32,
    )                                                        # (BB, M, N)
    inv_x = lax.rsqrt(jnp.sum(x * x, axis=-1))               # (BB, M)
    inv_t = lax.rsqrt(jnp.sum(t * t, axis=-1))               # (BB, N)
    out = out * inv_x[:, :, None] * inv_t[:, None, :]
    o_ref[...] = out.astype(o_ref.dtype)


@functools.partial(
    jax.jit, static_argnames=("block_b", "vmem_budget_bytes", "cast_to_bf16"))
def corr_layer(X, T, *, block_b=None, vmem_budget_bytes=None,
               cast_to_bf16=False):
    """Pallas implementation of _CorrLayer.forward(X, T).

    X: (..., M, S); T: (..., N, S) (layer swaps T's last two axes internally).
    Returns corr: (..., M, N).

    cast_to_bf16: opt-in HBM-traffic halving for bandwidth-bound chips (v5e);
    relaxes f32 input precision (~1e-3 rel error), compute stays f32.
    """
    assert X.shape[-1] == T.shape[-1], "sample axis must match"
    batch_shape = X.shape[:-2]
    assert T.shape[:-2] == batch_shape, "batch dims of X and T must match"

    M, S = X.shape[-2], X.shape[-1]
    N = T.shape[-2]
    out_dtype = jnp.result_type(X, T)

    B = 1
    for d in batch_shape:
        B *= d
    B = max(B, 1)

    Xc, Tc = (X, T)
    if cast_to_bf16:
        Xc = X.astype(jnp.bfloat16)
        Tc = T.astype(jnp.bfloat16)

    Xf = Xc.reshape((B, M, S))
    Tf = Tc.reshape((B, N, S))

    in_itemsize = jnp.dtype(Xf.dtype).itemsize
    out_itemsize = jnp.dtype(out_dtype).itemsize

    # Per-batch VMEM footprint: double-buffered pipeline buffers for inputs +
    # output, plus f32 compute intermediates (upcasts, product / result, row
    # norms).  Keeping the intermediates in the estimate is what protects
    # v7x's 64 MiB VMEM from the "estimate fits, reality spills" failure mode.
    in_bytes = in_itemsize * (M * S + N * S)
    out_bytes = out_itemsize * (M * N)
    if M == 1:
        scratch_bytes = 4 * (2 * N * S + S + 4 * N)          # x,t upcasts + x*t + norms
    else:
        scratch_bytes = 4 * (M * S + N * S + 2 * M * N + M + N)
    per_batch_bytes = 2 * (in_bytes + out_bytes) + scratch_bytes

    vmem_phys = _vmem_capacity_bytes()
    budget = (vmem_budget_bytes if vmem_budget_bytes is not None
              else max(8 * 1024 * 1024, vmem_phys // 4))      # 32 MiB v5e/v6e, 16 MiB v7x

    BB = int(block_b) if block_b is not None else _choose_block_b(
        B, per_batch_bytes, budget)
    BB = max(1, min(BB, B))

    # Tie the scoped-VMEM limit to the actual footprint and physical VMEM so a
    # user-supplied block_b / budget can't silently exceed the compiler limit.
    footprint = BB * per_batch_bytes
    limit = max(vmem_phys // 2, footprint + 8 * 1024 * 1024)
    limit = min(limit, max(32 * 1024 * 1024, vmem_phys - 8 * 1024 * 1024))

    compiler_params = pltpu.CompilerParams(
        dimension_semantics=("parallel",),     # batch axis sharded over v7x's 2 TCs
        vmem_limit_bytes=int(limit),
    )

    kernel = _corr_kernel_m1 if M == 1 else _corr_kernel_general

    # Ragged grid: no jnp.pad (saves a full extra HBM read+write of X and T).
    # Tail blocks read unspecified data; their rows are computed independently
    # and their out-of-bounds writes are dropped, so valid rows are unaffected.
    grid = (pl.cdiv(B, BB),)

    out = pl.pallas_call(
        kernel,
        out_shape=jax.ShapeDtypeStruct((B, M, N), out_dtype),
        grid=grid,
        in_specs=[
            pl.BlockSpec((BB, M, S), lambda i: (i, 0, 0)),
            pl.BlockSpec((BB, N, S), lambda i: (i, 0, 0)),
        ],
        out_specs=pl.BlockSpec((BB, M, N), lambda i: (i, 0, 0)),
        compiler_params=compiler_params,
    )(Xf, Tf)

    return out.reshape(batch_shape + (M, N))


def _reference(X, T):
    Tt = jnp.swapaxes(T, -1, -2)
    corr_xt = jnp.matmul(X, Tt)
    corr_xx = jnp.sum(jnp.square(X), -1, keepdims=True)
    corr_tt = jnp.sum(jnp.square(Tt), -2, keepdims=True)
    return corr_xt / (jnp.sqrt(corr_xx) * jnp.sqrt(corr_tt))


if __name__ == "__main__":
    key = jax.random.PRNGKey(0)
    kx, kt, kx2, kt2, kx3, kt3 = jax.random.split(key, 6)

    # 1) convca-style shapes (M == 1 fast path):
    #    X: (batch, 1, 1, n_samples), T: (batch, 1, n_classes, n_samples)
    batch, n_classes, n_samples = 2, 8, 128
    X = jax.random.normal(kx, (batch, 1, 1, n_samples), dtype=jnp.float32)
    T = jax.random.normal(kt, (batch, 1, n_classes, n_samples), dtype=jnp.float32)
    corr = jax.block_until_ready(corr_layer(X, T))
    ref = _reference(X, T)
    assert corr.shape == ref.shape == (batch, 1, 1, n_classes)
    assert jnp.allclose(corr, ref, atol=2e-5, rtol=2e-5), "mismatch (M==1)"

    # 2) M == 1 path with a ragged multi-step grid (B=40, BB=16 -> 3 steps):
    X2 = jax.random.normal(kx2, (40, 1, 256), dtype=jnp.float32)
    T2 = jax.random.normal(kt2, (40, 6, 256), dtype=jnp.float32)
    corr2 = jax.block_until_ready(corr_layer(X2, T2, block_b=16))
    ref2 = _reference(X2, T2)
    assert corr2.shape == ref2.shape == (40, 1, 6)
    assert jnp.allclose(corr2, ref2, atol=2e-5, rtol=2e-5), "mismatch (ragged grid)"

    # 3) general M > 1 path (batched MXU contraction, post-scaled norms):
    X3 = jax.random.normal(kx3, (3, 8, 128), dtype=jnp.float32)
    T3 = jax.random.normal(kt3, (3, 16, 128), dtype=jnp.float32)
    corr3 = jax.block_until_ready(corr_layer(X3, T3))
    ref3 = _reference(X3, T3)
    assert corr3.shape == ref3.shape == (3, 8, 16)
    assert jnp.allclose(corr3, ref3, atol=2e-5, rtol=2e-5), "mismatch (M>1)"

    # 4) opt-in bf16 input compression (v5e bandwidth saver), loose tolerance:
    corr4 = jax.block_until_ready(corr_layer(X2, T2, cast_to_bf16=True))
    assert corr4.shape == (40, 1, 6)
    assert jnp.allclose(corr4, ref2, atol=3e-2, rtol=3e-2), "mismatch (bf16 inputs)"

    print("KERNEL_OK")
</pallas_src>

<mosaic_0001>
module attributes {stable_mosaic.version = 11 : i64} {
  func.func @_corr_kernel_m1(%arg0: i32, %arg1: memref<2x1x128xf32, #tpu.memory_space<vmem>>, %arg2: memref<2x8x128xf32, #tpu.memory_space<vmem>>, %arg3: memref<2x1x8xf32, #tpu.memory_space<vmem>>) attributes {dimension_semantics = [#tpu.dimension_semantics<parallel>], iteration_bounds = array<i64: 1>, scalar_prefetch = 0 : i64, scratch_operands = 0 : i64, tpu.core_type = #tpu.core_type<tc>, window_params = [{transform_indices = @transform_0, window_bounds = array<i64: 2, 1, 128>}, {transform_indices = @transform_1, window_bounds = array<i64: 2, 8, 128>}, {transform_indices = @transform_2, window_bounds = array<i64: 2, 1, 8>}]} {
    %c0 = arith.constant 0 : index
    %c0_0 = arith.constant 0 : index
    %c0_1 = arith.constant 0 : index
    %0 = vector.load %arg1[%c0, %c0_0, %c0_1] : memref<2x1x128xf32, #tpu.memory_space<vmem>>, vector<2x1x128xf32>
    %c0_2 = arith.constant 0 : index
    %c0_3 = arith.constant 0 : index
    %c0_4 = arith.constant 0 : index
    %1 = vector.load %arg2[%c0_2, %c0_3, %c0_4] : memref<2x8x128xf32, #tpu.memory_space<vmem>>, vector<2x8x128xf32>
    %2 = vector.broadcast %0 : vector<2x1x128xf32> to vector<2x8x128xf32>
    %3 = arith.mulf %2, %1 : vector<2x8x128xf32>
    %cst = arith.constant dense<0.000000e+00> : vector<2x8xf32>
    %4 = vector.multi_reduction <add>, %3, %cst [2] : vector<2x8x128xf32> to vector<2x8xf32>
    %5 = arith.mulf %0, %0 : vector<2x1x128xf32>
    %cst_5 = arith.constant dense<0.000000e+00> : vector<2x1xf32>
    %6 = vector.multi_reduction <add>, %5, %cst_5 [2] : vector<2x1x128xf32> to vector<2x1xf32>
    %7 = math.rsqrt %6 : vector<2x1xf32>
    %8 = arith.mulf %1, %1 : vector<2x8x128xf32>
    %cst_6 = arith.constant dense<0.000000e+00> : vector<2x8xf32>
    %9 = vector.multi_reduction <add>, %8, %cst_6 [2] : vector<2x8x128xf32> to vector<2x8xf32>
    %10 = math.rsqrt %9 : vector<2x8xf32>
    %11 = vector.broadcast %7 : vector<2x1xf32> to vector<2x8xf32>
    %12 = arith.mulf %4, %11 : vector<2x8xf32>
    %13 = arith.mulf %12, %10 : vector<2x8xf32>
    %14 = vector.shape_cast %13 : vector<2x8xf32> to vector<2x1x8xf32>
    %c0_7 = arith.constant 0 : index
    %c0_8 = arith.constant 0 : index
    %c0_9 = arith.constant 0 : index
    %15 = vector.load %arg3[%c0_7, %c0_8, %c0_9] : memref<2x1x8xf32, #tpu.memory_space<vmem>>, vector<2x1x8xf32>
    tpu.vector_store %arg3[%c0_7, %c0_8, %c0_9], %14 {strides = array<i32>} : memref<2x1x8xf32, #tpu.memory_space<vmem>>, vector<2x1x8xf32>,
    return
  }
  func.func @transform_0(%arg0: i32) -> (i32, i32, i32) {
    %c0_i32 = arith.constant 0 : i32
    %c0_i32_0 = arith.constant 0 : i32
    %c0_i32_1 = arith.constant 0 : i32
    return %arg0, %c0_i32, %c0_i32_0 : i32, i32, i32
  }
  func.func @transform_1(%arg0: i32) -> (i32, i32, i32) {
    %c0_i32 = arith.constant 0 : i32
    %c0_i32_0 = arith.constant 0 : i32
    %c0_i32_1 = arith.constant 0 : i32
    return %arg0, %c0_i32, %c0_i32_0 : i32, i32, i32
  }
  func.func @transform_2(%arg0: i32) -> (i32, i32, i32) {
    %c0_i32 = arith.constant 0 : i32
    %c0_i32_0 = arith.constant 0 : i32
    %c0_i32_1 = arith.constant 0 : i32
    return %arg0, %c0_i32, %c0_i32_0 : i32, i32, i32
  }
}

</mosaic_0001>

<llo_original>
// kernel: corr_layer.1
$region0: #{corr_layer.1}
  #allocation0 [shape = 'u32[]', space=smem, size = 0x4, offset = 0x4, fixed_abs, tag = 'smem constant byte address 0x4 - core index']
  #allocation1 [shape = 'u32[144,128]{1,0:T(1,128)}', space=vmem, size = 0x12000, scoped, tag = 'internal scratch']
  %s0 = inlined_call_operand.vmem [shape: f32[2,1,128], index: 0, kind: input, shape index: {}]
  %s1 = inlined_call_operand.hbm [shape: f32[2,8,128], index: 1, kind: input, shape index: {}]
  %s2 = inlined_call_operand.hbm [shape: f32[2,1,8], index: 2, kind: output, shape index: {}]
  %s3 = sld [smem:[#allocation0]]
  $region22: #{corr_layer.1} parent=0
    _
  %s5 = ssub.s32 1, %s3
  %s6 = scalar_select 0, %s5, %s3
  $region1: #{corr_layer.1} parent=0
    #allocation2 [shape = 'u8[8192]{0}', space=vmem, size = 0x2000, scoped, tag = 'input window, operand 1, single buffered']
    #allocation3 [shape = 's32[1]{0}', space=sflag, size = 0x4, scoped, tag = 'scoped memory for corr_layer.1']
    #allocation4 [shape = 's32[1]{0}', space=sflag, size = 0x4, scoped, tag = 'scoped memory for corr_layer.1']
    #allocation5 [shape = 'u8[1024]{0}', space=vmem, size = 0x400, scoped, tag = 'output window, operand 0, single buffered']
    %7 = vsyncpa [#allocation3], 0
    %8 = vsyncpa [#allocation4], 0
    // Predicated region
    $region2: #{corr_layer.1} parent=1 // pred_check
      _
    $region3: #{corr_layer.1} parent=1 // pred_check_branch
      %10 = sbr.rel (0) target = $region5
    $region4: #{corr_layer.1} parent=1 // pred_region
      _
    $region5: #{corr_layer.1} parent=1 // pred_fallthru
      _
    // Predicated region
    $region6: #{corr_layer.1} parent=1 // pred_check
      _
    $region7: #{corr_layer.1} parent=1 // pred_check_branch
      %12 = sbr.rel (0) target = $region9
    $region8: #{corr_layer.1} parent=1 // pred_region
      %s14 = ssub.s32 256, 256
      %15 = vsyncadd [#allocation3], %s14
      %s16 = sshll.u32 [#allocation2], 4
      %s17 = int_to_ptr.vmem [resolvable:$true] %s16
      %22 = dma.hbm_to_vmem [thread:$0]  %s1, 256, %s17, [#allocation3], 128, 128, 8
    $region9: #{corr_layer.1} parent=1 // pred_fallthru
      _
    // Predicated region
    $region10: #{corr_layer.1} parent=1 // pred_check
      _
    $region11: #{corr_layer.1} parent=1 // pred_check_branch
      %24 = sbr.rel (0) target = $region13
    $region12: #{corr_layer.1} parent=1 // pred_region
      %25 = dma.done [#allocation3], 256
    $region13: #{corr_layer.1} parent=1 // pred_fallthru
      _
    %v26 = vld [vmem:[%s0] sm:$0x1]
    %v27 = vld [vmem:[%s0 + $0x1] sm:$0x1]
    %v28 = vld [vmem:[#allocation2] sm:$0xff]
    %v29 = vld [vmem:[#allocation2 + $0x8] sm:$0xff]
    %v32 = vlaneseq
    %v33 = vshrl.u32 %v32, 7
    %v34 = vsub.s32 0, %v33
    %v35 = vrot.slane %v26, %v34
    %v36 = vlaneseq
    %v37 = vshrl.u32 %v36, 7
    %v38 = vsub.s32 0, %v37
    %v39 = vrot.slane %v27, %v38
    %v42 = vmul.f32 %v35, %v28
    %v43 = vmul.f32 %v39, %v29
    %44 = vadd.xlane.f32.xlu0 %v42
    %v45 = vpop.xlane.xlu0 %44
    %46 = vadd.xlane.f32.xlu0 %v43
    %v47 = vpop.xlane.xlu0 %46
    %v48 = vmul.f32 %v26, %v26
    %v49 = vmul.f32 %v27, %v27
    %vm50 = vcmask 1040384
    %v51 = vsel %vm50, %v48, 0.0
    %52 = vadd.xlane.f32.xlu0 %v51
    %v53 = vpop.xlane.xlu0 %52
    %v54 = vsel %vm50, %v49, 0.0
    %55 = vadd.xlane.f32.xlu0 %v54
    %v56 = vpop.xlane.xlu0 %55
    %v57 = vrsqrt.pop %v53
    %v58 = vrsqrt.pop %v56
    %v59 = vmul.f32 %v28, %v28
    %v60 = vmul.f32 %v29, %v29
    %61 = vadd.xlane.f32.xlu0 %v59
    %v62 = vpop.xlane.xlu0 %61
    %63 = vadd.xlane.f32.xlu0 %v60
    %v64 = vpop.xlane.xlu0 %63
    %v65 = vrsqrt.pop %v62
    %v66 = vrsqrt.pop %v64
    %v67 = vlaneseq
    %v68 = vshrl.u32 %v67, 7
    %v69 = vsub.s32 0, %v68
    %v70 = vrot.slane %v57, %v69
    %v71 = vlaneseq
    %v72 = vshrl.u32 %v71, 7
    %v73 = vsub.s32 0, %v72
    %v74 = vrot.slane %v58, %v73
    %v75 = vmul.f32 %v45, %v70
    %v76 = vmul.f32 %v47, %v74
    %v77 = vmul.f32 %v75, %v65
    %v78 = vmul.f32 %v76, %v66
    %v81 = vlaneseq
    %v82 = vand.u32 %v81, 127
    %v83 = vlaneseq
    %v84 = vshrl.u32 %v83, 7
    %v85 = vsub.s32 %v82, %v84
    %v86 = vrot.slane %v77, %v85
    %v87 = vlaneseq
    %v88 = vshrl.u32 %v87, 7
    %v89 = vsub.s32 %v82, %v88
    %v90 = vrot.slane %v78, %v89
    %vm93 = vcmask 57344
    %94 = vst.msk [vmem:[#allocation5] sm:$0x1] %vm93, %v86
    %95 = vst.msk [vmem:[#allocation5 + $0x1] sm:$0x1] %vm93, %v90
    // Predicated region
    $region14: #{corr_layer.1} parent=1 // pred_check
      _
    $region15: #{corr_layer.1} parent=1 // pred_check_branch
      %97 = sbr.rel (0) target = $region17
    $region16: #{corr_layer.1} parent=1 // pred_region
      %s99 = ssub.s32 32, 32
      %100 = vsyncadd [#allocation4], %s99
      %s101 = sshll.u32 [#allocation5], 4
      %s102 = int_to_ptr.vmem [resolvable:$true] %s101
      %107 = dma.vmem_to_hbm [thread:$0]  %s102, 32, %s2, [#allocation4], 16, 16, 1
    $region17: #{corr_layer.1} parent=1 // pred_fallthru
      _
    // Predicated region
    $region18: #{corr_layer.1} parent=1 // pred_check
      _
    $region19: #{corr_layer.1} parent=1 // pred_check_branch
      %109 = sbr.rel (0) target = $region21
    $region20: #{corr_layer.1} parent=1 // pred_region
      %110 = dma.done [#allocation4], 32
    $region21: #{corr_layer.1} parent=1 // pred_fallthru
      _
    %111 = vsyncpa [#allocation3], 1
    %112 = vsyncpa [#allocation4], 1

</llo_original>
